<compile_context>
chip_gen: v7x
topology: tpu7x:2x2x1
jax: 0.10.0
libtpu: 0.0.40
codegen_flags: <defaults>
</compile_context>

<pallas_src>
import functools

import jax
import jax.numpy as jnp
from jax.experimental import pallas as pl
from jax.experimental.pallas import tpu as pltpu

LANE = 128          # vreg lane width (last dim)
BF16_SUBLANE = 16   # bf16 packs 16 rows per vreg (sublane dim)


def _round_up(n, m):
    return ((n + m - 1) // m) * m


def _leaky_relu(z, negative_slope=0.01):
    return jnp.where(z > 0, z, negative_slope * z)


def _pad2(a, rows, cols):
    r, c = a.shape
    return jnp.pad(a, ((0, rows - r), (0, cols - c)))


# ----------------------------------------------------------------------------
# Kernel: one batch tile, all three layers fused.  Weights are bf16
# (MXU-native); x is loaded as f32 and cast to bf16 in-kernel; accumulation,
# bias add and LeakyReLU stay in f32.
# ----------------------------------------------------------------------------
def embednet_kernel(x_ref, w1_ref, b1_ref, w2_ref, b2_ref, w3_ref, b3_ref,
                    o_ref):
    x = x_ref[...].astype(jnp.bfloat16)                       # in-kernel cast

    h = jnp.dot(x, w1_ref[...], preferred_element_type=jnp.float32)
    h = _leaky_relu(h + b1_ref[...])                           # f32 VPU

    h = jnp.dot(h.astype(jnp.bfloat16), w2_ref[...],
                preferred_element_type=jnp.float32)
    h = _leaky_relu(h + b2_ref[...])

    h = jnp.dot(h.astype(jnp.bfloat16), w3_ref[...],
                preferred_element_type=jnp.float32)
    h = _leaky_relu(h + b3_ref[...])

    o_ref[...] = h.astype(o_ref.dtype)                         # lane-dense store


# ----------------------------------------------------------------------------
# One-time parameter prep (hoisted out of the forward path).
# Pads hidden/feature dims to the 128-lane width (zero padding -> results
# unchanged) and casts weights to bf16.  Do this once and reuse.
# ----------------------------------------------------------------------------
def prepare_embednet_params(params):
    w1, b1 = params["w1"], params["b1"]
    w2, b2 = params["w2"], params["b2"]
    w3, b3 = params["w3"], params["b3"]
    in_dim, h1_dim = w1.shape
    feat_dim = w3.shape[1]

    h1_p = _round_up(h1_dim, LANE)
    feat_p = _round_up(feat_dim, LANE)

    return {
        # K of the first matmul stays = in_dim (x is fed unpadded).
        "w1": _pad2(w1, in_dim, h1_p).astype(jnp.bfloat16),
        "b1": _pad2(b1, 1, h1_p).astype(jnp.float32),
        "w2": _pad2(w2, h1_p, h1_p).astype(jnp.bfloat16),
        "b2": _pad2(b2, 1, h1_p).astype(jnp.float32),
        "w3": _pad2(w3, h1_p, feat_p).astype(jnp.bfloat16),
        "b3": _pad2(b3, 1, feat_p).astype(jnp.float32),
    }


def _choose_block_b(B):
    """Batch-tile heuristic: single tile for tiny B; >=2 tiles for B>32 so both
    v7x TensorCores get work; cap at 1024 rows (v6e HBM-roofline sweet spot)."""
    if B <= 32:
        return _round_up(B, BF16_SUBLANE)
    half = (B + 1) // 2
    return min(1024, _round_up(half, BF16_SUBLANE))


# ----------------------------------------------------------------------------
# Forward: no per-call weight prep, no lane-padding of x, batch rows padded
# only when B is not a multiple of the tile.
# ----------------------------------------------------------------------------
@functools.partial(jax.jit,
                   static_argnames=("feat_dim", "block_b", "out_dtype"))
def embednet_forward(x, prepped, *, feat_dim=None, block_b=None,
                     out_dtype=jnp.float32):
    """x: (B, input_dim) f32.  prepped: output of prepare_embednet_params."""
    B, in_dim = x.shape
    h1_p = prepped["w1"].shape[1]
    feat_p = prepped["w3"].shape[1]
    if feat_dim is None:
        feat_dim = feat_p

    if block_b is None:
        block_b = _choose_block_b(B)
    B_p = _round_up(B, block_b)
    if B_p != B:
        x = jnp.pad(x, ((0, B_p - B), (0, 0)))   # batch rows only

    grid = (B_p // block_b,)

    # Constant block index (0, 0): weights/biases DMA'd once, VMEM-resident
    # across all batch tiles.
    const = lambda shape: pl.BlockSpec(shape, lambda i: (0, 0))

    out_p = pl.pallas_call(
        embednet_kernel,
        out_shape=jax.ShapeDtypeStruct((B_p, feat_p), out_dtype),
        grid_spec=pl.GridSpec(
            grid=grid,
            in_specs=[
                # x: unpadded last dim (= full array dim, legal), f32.
                pl.BlockSpec((block_b, in_dim), lambda i: (i, 0)),
                const((in_dim, h1_p)),   # w1
                const((1, h1_p)),        # b1
                const((h1_p, h1_p)),     # w2
                const((1, h1_p)),        # b2
                const((h1_p, feat_p)),   # w3
                const((1, feat_p)),      # b3
            ],
            out_specs=pl.BlockSpec((block_b, feat_p), lambda i: (i, 0)),
        ),
        compiler_params=pltpu.CompilerParams(
            dimension_semantics=("parallel",)),
    )(x, prepped["w1"], prepped["b1"], prepped["w2"], prepped["b2"],
      prepped["w3"], prepped["b3"])

    # Strip padding (batch rows + feature lanes).  Consumers that can work on
    # the padded, lane-dense buffer directly may skip this slice.
    return out_p[:B, :feat_dim]


# ----------------------------------------------------------------------------
# Params + references
# ----------------------------------------------------------------------------
def init_embednet_params(key, input_dim, hidden1_dim, feature_dim):
    """Deterministic init mimicking PyTorch's default U(-1/sqrt(fan_in), ...)."""
    def linear(key, fan_in, fan_out):
        kw, kb = jax.random.split(key)
        bound = 1.0 / jnp.sqrt(float(fan_in))
        # stored as (in, out) so the kernel computes x @ W directly
        w = jax.random.uniform(kw, (fan_in, fan_out), jnp.float32, -bound, bound)
        b = jax.random.uniform(kb, (1, fan_out), jnp.float32, -bound, bound)
        return w, b

    k1, k2, k3 = jax.random.split(key, 3)
    w1, b1 = linear(k1, input_dim, hidden1_dim)
    w2, b2 = linear(k2, hidden1_dim, hidden1_dim)
    w3, b3 = linear(k3, hidden1_dim, feature_dim)
    return {"w1": w1, "b1": b1, "w2": w2, "b2": b2, "w3": w3, "b3": b3}


def embednet_reference_f32(x, p):
    """Pure-JAX f32 reference of the PyTorch forward pass."""
    h = _leaky_relu(x @ p["w1"] + p["b1"])
    h = _leaky_relu(h @ p["w2"] + p["b2"])
    h = _leaky_relu(h @ p["w3"] + p["b3"])
    return h


def embednet_reference_bf16(x, p):
    """Reference with the same bf16-input / f32-accumulate matmul precision."""
    def lin(h, w, b):
        y = jnp.dot(h.astype(jnp.bfloat16), w.astype(jnp.bfloat16),
                    preferred_element_type=jnp.float32) + b
        return _leaky_relu(y)
    h = lin(x, p["w1"], p["b1"])
    h = lin(h, p["w2"], p["b2"])
    h = lin(h, p["w3"], p["b3"])
    return h


if __name__ == "__main__":
    # Small shapes consistent with EmbedNet(input_dim, output_dim, hidden1_dim,
    # hidden2_dim, feature_dim); output_dim / hidden2_dim are unused in forward.
    batch = 16
    input_dim = 32
    hidden1_dim = 64
    feature_dim = 32

    key = jax.random.PRNGKey(0)
    k_params, k_x = jax.random.split(key)

    params = init_embednet_params(k_params, input_dim, hidden1_dim, feature_dim)
    x = jax.random.normal(k_x, (batch, input_dim), jnp.float32)

    # One-time parameter prep (hoisted out of the per-call forward path).
    prepped = prepare_embednet_params(params)
    prepped = jax.tree_util.tree_map(jax.block_until_ready, prepped)

    out = embednet_forward(x, prepped, feat_dim=feature_dim)
    out = jax.block_until_ready(out)

    assert out.shape == (batch, feature_dim)

    # Exactness of the kernel logic (same bf16/f32 matmul precision).
    ref_bf16 = embednet_reference_bf16(x, params)
    assert jnp.allclose(out, ref_bf16, atol=2e-3, rtol=2e-3), \
        "mismatch vs bf16-precision reference"

    # Accuracy vs full-f32 PyTorch-equivalent math (bf16 MXU-input tradeoff).
    ref_f32 = embednet_reference_f32(x, params)
    assert jnp.allclose(out, ref_f32, atol=3e-2, rtol=3e-2), \
        "mismatch vs f32 reference beyond bf16 tolerance"

    print("KERNEL_OK")
</pallas_src>

<mosaic_0001>
module attributes {stable_mosaic.version = 11 : i64} {
  func.func @embednet_kernel(%arg0: i32, %arg1: memref<16x32xf32, #tpu.memory_space<vmem>>, %arg2: memref<32x128xbf16, #tpu.memory_space<vmem>>, %arg3: memref<1x128xf32, #tpu.memory_space<vmem>>, %arg4: memref<128x128xbf16, #tpu.memory_space<vmem>>, %arg5: memref<1x128xf32, #tpu.memory_space<vmem>>, %arg6: memref<128x128xbf16, #tpu.memory_space<vmem>>, %arg7: memref<1x128xf32, #tpu.memory_space<vmem>>, %arg8: memref<16x128xf32, #tpu.memory_space<vmem>>) attributes {dimension_semantics = [#tpu.dimension_semantics<parallel>], iteration_bounds = array<i64: 1>, scalar_prefetch = 0 : i64, scratch_operands = 0 : i64, tpu.core_type = #tpu.core_type<tc>, window_params = [{transform_indices = @transform_0, window_bounds = array<i64: 16, 32>}, {pipeline_mode = #tpu.pipeline_mode<synchronous>, transform_indices = @transform_1, window_bounds = array<i64: 32, 128>}, {pipeline_mode = #tpu.pipeline_mode<synchronous>, transform_indices = @transform_2, window_bounds = array<i64: 1, 128>}, {pipeline_mode = #tpu.pipeline_mode<synchronous>, transform_indices = @transform_3, window_bounds = array<i64: 128, 128>}, {pipeline_mode = #tpu.pipeline_mode<synchronous>, transform_indices = @transform_4, window_bounds = array<i64: 1, 128>}, {pipeline_mode = #tpu.pipeline_mode<synchronous>, transform_indices = @transform_5, window_bounds = array<i64: 128, 128>}, {pipeline_mode = #tpu.pipeline_mode<synchronous>, transform_indices = @transform_6, window_bounds = array<i64: 1, 128>}, {transform_indices = @transform_7, window_bounds = array<i64: 16, 128>}]} {
    %c0 = arith.constant 0 : index
    %c0_0 = arith.constant 0 : index
    %0 = vector.load %arg1[%c0, %c0_0] : memref<16x32xf32, #tpu.memory_space<vmem>>, vector<16x32xf32>
    %1 = arith.truncf %0 : vector<16x32xf32> to vector<16x32xbf16>
    %c0_1 = arith.constant 0 : index
    %c0_2 = arith.constant 0 : index
    %2 = vector.load %arg2[%c0_1, %c0_2] : memref<32x128xbf16, #tpu.memory_space<vmem>>, vector<32x128xbf16>
    %cst = arith.constant dense<0.000000e+00> : vector<16x128xf32>
    %3 = tpu.matmul %1, %2, %cst {dimension_numbers = #tpu.dot_dimension_numbers<[1], [0], [0], [1], [0, 0, 1, 1], [], []>} : vector<16x32xbf16>, vector<32x128xbf16>, vector<16x128xf32> -> vector<16x128xf32>
    %c0_3 = arith.constant 0 : index
    %c0_4 = arith.constant 0 : index
    %4 = vector.load %arg3[%c0_3, %c0_4] : memref<1x128xf32, #tpu.memory_space<vmem>>, vector<1x128xf32>
    %5 = vector.broadcast %4 : vector<1x128xf32> to vector<16x128xf32>
    %6 = arith.addf %3, %5 : vector<16x128xf32>
    %cst_5 = arith.constant 0.000000e+00 : f32
    %7 = vector.broadcast %cst_5 : f32 to vector<16x128xf32>
    %8 = arith.cmpf ogt, %6, %7 : vector<16x128xf32>
    %cst_6 = arith.constant 0.00999999977 : f32
    %9 = vector.broadcast %cst_6 : f32 to vector<16x128xf32>
    %10 = arith.mulf %9, %6 : vector<16x128xf32>
    %11 = arith.select %8, %6, %10 : vector<16x128xi1>, vector<16x128xf32>
    %12 = arith.truncf %11 : vector<16x128xf32> to vector<16x128xbf16>
    %c0_7 = arith.constant 0 : index
    %c0_8 = arith.constant 0 : index
    %13 = vector.load %arg4[%c0_7, %c0_8] : memref<128x128xbf16, #tpu.memory_space<vmem>>, vector<128x128xbf16>
    %cst_9 = arith.constant dense<0.000000e+00> : vector<16x128xf32>
    %14 = tpu.matmul %12, %13, %cst_9 {dimension_numbers = #tpu.dot_dimension_numbers<[1], [0], [0], [1], [0, 0, 1, 1], [], []>} : vector<16x128xbf16>, vector<128x128xbf16>, vector<16x128xf32> -> vector<16x128xf32>
    %c0_10 = arith.constant 0 : index
    %c0_11 = arith.constant 0 : index
    %15 = vector.load %arg5[%c0_10, %c0_11] : memref<1x128xf32, #tpu.memory_space<vmem>>, vector<1x128xf32>
    %16 = vector.broadcast %15 : vector<1x128xf32> to vector<16x128xf32>
    %17 = arith.addf %14, %16 : vector<16x128xf32>
    %cst_12 = arith.constant 0.000000e+00 : f32
    %18 = vector.broadcast %cst_12 : f32 to vector<16x128xf32>
    %19 = arith.cmpf ogt, %17, %18 : vector<16x128xf32>
    %cst_13 = arith.constant 0.00999999977 : f32
    %20 = vector.broadcast %cst_13 : f32 to vector<16x128xf32>
    %21 = arith.mulf %20, %17 : vector<16x128xf32>
    %22 = arith.select %19, %17, %21 : vector<16x128xi1>, vector<16x128xf32>
    %23 = arith.truncf %22 : vector<16x128xf32> to vector<16x128xbf16>
    %c0_14 = arith.constant 0 : index
    %c0_15 = arith.constant 0 : index
    %24 = vector.load %arg6[%c0_14, %c0_15] : memref<128x128xbf16, #tpu.memory_space<vmem>>, vector<128x128xbf16>
    %cst_16 = arith.constant dense<0.000000e+00> : vector<16x128xf32>
    %25 = tpu.matmul %23, %24, %cst_16 {dimension_numbers = #tpu.dot_dimension_numbers<[1], [0], [0], [1], [0, 0, 1, 1], [], []>} : vector<16x128xbf16>, vector<128x128xbf16>, vector<16x128xf32> -> vector<16x128xf32>
    %c0_17 = arith.constant 0 : index
    %c0_18 = arith.constant 0 : index
    %26 = vector.load %arg7[%c0_17, %c0_18] : memref<1x128xf32, #tpu.memory_space<vmem>>, vector<1x128xf32>
    %27 = vector.broadcast %26 : vector<1x128xf32> to vector<16x128xf32>
    %28 = arith.addf %25, %27 : vector<16x128xf32>
    %cst_19 = arith.constant 0.000000e+00 : f32
    %29 = vector.broadcast %cst_19 : f32 to vector<16x128xf32>
    %30 = arith.cmpf ogt, %28, %29 : vector<16x128xf32>
    %cst_20 = arith.constant 0.00999999977 : f32
    %31 = vector.broadcast %cst_20 : f32 to vector<16x128xf32>
    %32 = arith.mulf %31, %28 : vector<16x128xf32>
    %33 = arith.select %30, %28, %32 : vector<16x128xi1>, vector<16x128xf32>
    %c0_21 = arith.constant 0 : index
    %c0_22 = arith.constant 0 : index
    %34 = vector.load %arg8[%c0_21, %c0_22] : memref<16x128xf32, #tpu.memory_space<vmem>>, vector<16x128xf32>
    tpu.vector_store %arg8[%c0_21, %c0_22], %33 {strides = array<i32>} : memref<16x128xf32, #tpu.memory_space<vmem>>, vector<16x128xf32>,
    return
  }
  func.func @transform_0(%arg0: i32) -> (i32, i32) {
    %c0_i32 = arith.constant 0 : i32
    %c0_i32_0 = arith.constant 0 : i32
    return %arg0, %c0_i32 : i32, i32
  }
  func.func @transform_1(%arg0: i32) -> (i32, i32) {
    %c0_i32 = arith.constant 0 : i32
    %c0_i32_0 = arith.constant 0 : i32
    %c0_i32_1 = arith.constant 0 : i32
    return %c0_i32, %c0_i32_0 : i32, i32
  }
  func.func @transform_2(%arg0: i32) -> (i32, i32) {
    %c0_i32 = arith.constant 0 : i32
    %c0_i32_0 = arith.constant 0 : i32
    %c0_i32_1 = arith.constant 0 : i32
    return %c0_i32, %c0_i32_0 : i32, i32
  }
  func.func @transform_3(%arg0: i32) -> (i32, i32) {
    %c0_i32 = arith.constant 0 : i32
    %c0_i32_0 = arith.constant 0 : i32
    %c0_i32_1 = arith.constant 0 : i32
    return %c0_i32, %c0_i32_0 : i32, i32
  }
  func.func @transform_4(%arg0: i32) -> (i32, i32) {
    %c0_i32 = arith.constant 0 : i32
    %c0_i32_0 = arith.constant 0 : i32
    %c0_i32_1 = arith.constant 0 : i32
    return %c0_i32, %c0_i32_0 : i32, i32
  }
  func.func @transform_5(%arg0: i32) -> (i32, i32) {
    %c0_i32 = arith.constant 0 : i32
    %c0_i32_0 = arith.constant 0 : i32
    %c0_i32_1 = arith.constant 0 : i32
    return %c0_i32, %c0_i32_0 : i32, i32
  }
  func.func @transform_6(%arg0: i32) -> (i32, i32) {
    %c0_i32 = arith.constant 0 : i32
    %c0_i32_0 = arith.constant 0 : i32
    %c0_i32_1 = arith.constant 0 : i32
    return %c0_i32, %c0_i32_0 : i32, i32
  }
  func.func @transform_7(%arg0: i32) -> (i32, i32) {
    %c0_i32 = arith.constant 0 : i32
    %c0_i32_0 = arith.constant 0 : i32
    return %arg0, %c0_i32 : i32, i32
  }
}

</mosaic_0001>

<llo_original>
// kernel: embednet_forward.1
$region0: #{embednet_forward.1}
  #allocation0 [shape = 'u32[]', space=smem, size = 0x4, offset = 0x4, fixed_abs, tag = 'smem constant byte address 0x4 - core index']
  #allocation1 [shape = 'u32[144,128]{1,0:T(1,128)}', space=vmem, size = 0x12000, scoped, tag = 'internal scratch']
  %s0 = inlined_call_operand.hbm [shape: f32[16,32], index: 0, kind: input, shape index: {}]
  %s1 = inlined_call_operand.hbm [shape: bf16[32,128], index: 1, kind: input, shape index: {}]
  %s2 = inlined_call_operand.vmem [shape: f32[1,128], index: 2, kind: input, shape index: {}]
  %s3 = inlined_call_operand.hbm [shape: bf16[128,128], index: 3, kind: input, shape index: {}]
  %s4 = inlined_call_operand.vmem [shape: f32[1,128], index: 4, kind: input, shape index: {}]
  %s5 = inlined_call_operand.hbm [shape: bf16[128,128], index: 5, kind: input, shape index: {}]
  %s6 = inlined_call_operand.vmem [shape: f32[1,128], index: 6, kind: input, shape index: {}]
  %s7 = inlined_call_operand.hbm [shape: f32[16,128], index: 7, kind: output, shape index: {}]
  %s8 = sld [smem:[#allocation0]]
  $region54: #{embednet_forward.1} parent=0
    _
  %s10 = ssub.s32 1, %s8
  %s11 = scalar_select 0, %s10, %s8
  $region1: #{embednet_forward.1} parent=0
    #allocation2 [shape = 'u8[8192]{0}', space=vmem, size = 0x2000, scoped, tag = 'input window, operand 0, single buffered']
    #allocation3 [shape = 's32[1]{0}', space=sflag, size = 0x4, scoped, tag = 'scoped memory for embednet_forward.1']
    #allocation4 [shape = 's32[1]{0}', space=sflag, size = 0x4, scoped, tag = 'scoped memory for embednet_forward.1']
    #allocation5 [shape = 'u8[8192]{0}', space=vmem, size = 0x2000, scoped, tag = 'input window, operand 1, single buffered']
    #allocation6 [shape = 's32[1]{0}', space=sflag, size = 0x4, scoped, tag = 'scoped memory for embednet_forward.1']
    #allocation7 [shape = 'u8[32768]{0}', space=vmem, size = 0x8000, scoped, tag = 'input window, operand 3, single buffered']
    #allocation8 [shape = 'u8[32768]{0}', space=vmem, size = 0x8000, scoped, tag = 'input window, operand 5, single buffered']
    #allocation9 [shape = 's32[1]{0}', space=sflag, size = 0x4, scoped, tag = 'scoped memory for embednet_forward.1']
    #allocation10 [shape = 'u8[8192]{0}', space=vmem, size = 0x2000, scoped, tag = 'output window, operand 0, single buffered']
    %12 = vsyncpa [#allocation3], 0
    %13 = vsyncpa [#allocation6], 0
    %14 = vsyncpa [#allocation9], 0
    %15 = vsyncpa [#allocation4], 0
    // Predicated region
    $region2: #{embednet_forward.1} parent=1 // pred_check
      _
    $region3: #{embednet_forward.1} parent=1 // pred_check_branch
      %17 = sbr.rel (0) target = $region5
    $region4: #{embednet_forward.1} parent=1 // pred_region
      %s19 = ssub.s32 256, 256
      %20 = vsyncadd [#allocation3], %s19
      %s21 = sshll.u32 [#allocation2], 4
      %s22 = int_to_ptr.vmem [resolvable:$true] %s21
      %27 = dma.hbm_to_vmem [thread:$0]  %s0, 256, %s22, [#allocation3], 128, 128, 8
    $region5: #{embednet_forward.1} parent=1 // pred_fallthru
      _
    // Predicated region
    $region6: #{embednet_forward.1} parent=1 // pred_check
      _
    $region7: #{embednet_forward.1} parent=1 // pred_check_branch
      %29 = sbr.rel (0) target = $region9
    $region8: #{embednet_forward.1} parent=1 // pred_region
      %s31 = ssub.s32 256, 256
      %32 = vsyncadd [#allocation6], %s31
      %s33 = sshll.u32 [#allocation5], 4
      %s34 = int_to_ptr.vmem [resolvable:$true] %s33
      %39 = dma.hbm_to_vmem [thread:$0]  %s1, 256, %s34, [#allocation6], 64, 64, 4
    $region9: #{embednet_forward.1} parent=1 // pred_fallthru
      _
    // Predicated region
    $region10: #{embednet_forward.1} parent=1 // pred_check
      _
    $region11: #{embednet_forward.1} parent=1 // pred_check_branch
      %41 = sbr.rel (0) target = $region13
    $region12: #{embednet_forward.1} parent=1 // pred_region
      _
    $region13: #{embednet_forward.1} parent=1 // pred_fallthru
      _
    // Predicated region
    $region14: #{embednet_forward.1} parent=1 // pred_check
      _
    $region15: #{embednet_forward.1} parent=1 // pred_check_branch
      %43 = sbr.rel (0) target = $region17
    $region16: #{embednet_forward.1} parent=1 // pred_region
      %s45 = ssub.s32 1024, 1024
      %46 = vsyncadd [#allocation6], %s45
      %s47 = sshll.u32 [#allocation7], 4
      %s48 = int_to_ptr.vmem [resolvable:$true] %s47
      %53 = dma.hbm_to_vmem [thread:$0]  %s3, 1024, %s48, [#allocation6], 64, 64, 4
    $region17: #{embednet_forward.1} parent=1 // pred_fallthru
      _
    // Predicated region
    $region18: #{embednet_forward.1} parent=1 // pred_check
      _
    $region19: #{embednet_forward.1} parent=1 // pred_check_branch
      %55 = sbr.rel (0) target = $region21
    $region20: #{embednet_forward.1} parent=1 // pred_region
      _
    $region21: #{embednet_forward.1} parent=1 // pred_fallthru
      _
    // Predicated region
    $region22: #{embednet_forward.1} parent=1 // pred_check
      _
    $region23: #{embednet_forward.1} parent=1 // pred_check_branch
      %57 = sbr.rel (0) target = $region25
    $region24: #{embednet_forward.1} parent=1 // pred_region
      %s59 = ssub.s32 1024, 1024
      %60 = vsyncadd [#allocation9], %s59
      %s61 = sshll.u32 [#allocation8], 4
      %s62 = int_to_ptr.vmem [resolvable:$true] %s61
      %67 = dma.hbm_to_vmem [thread:$0]  %s5, 1024, %s62, [#allocation9], 64, 64, 4
    $region25: #{embednet_forward.1} parent=1 // pred_fallthru
      _
    // Predicated region
    $region26: #{embednet_forward.1} parent=1 // pred_check
      _
    $region27: #{embednet_forward.1} parent=1 // pred_check_branch
      %69 = sbr.rel (0) target = $region29
    $region28: #{embednet_forward.1} parent=1 // pred_region
      _
    $region29: #{embednet_forward.1} parent=1 // pred_fallthru
      _
    // Predicated region
    $region30: #{embednet_forward.1} parent=1 // pred_check
      _
    $region31: #{embednet_forward.1} parent=1 // pred_check_branch
      %71 = sbr.rel (0) target = $region33
    $region32: #{embednet_forward.1} parent=1 // pred_region
      %72 = dma.done [#allocation3], 256
    $region33: #{embednet_forward.1} parent=1 // pred_fallthru
      _
    // Predicated region
    $region34: #{embednet_forward.1} parent=1 // pred_check
      _
    $region35: #{embednet_forward.1} parent=1 // pred_check_branch
      %74 = sbr.rel (0) target = $region37
    $region36: #{embednet_forward.1} parent=1 // pred_region
      %75 = dma.done [#allocation6], 256
    $region37: #{embednet_forward.1} parent=1 // pred_fallthru
      _
    // Predicated region
    $region38: #{embednet_forward.1} parent=1 // pred_check
      _
    $region39: #{embednet_forward.1} parent=1 // pred_check_branch
      %77 = sbr.rel (0) target = $region41
    $region40: #{embednet_forward.1} parent=1 // pred_region
      %78 = dma.done [#allocation6], 1024
    $region41: #{embednet_forward.1} parent=1 // pred_fallthru
      _
    // Predicated region
    $region42: #{embednet_forward.1} parent=1 // pred_check
      _
    $region43: #{embednet_forward.1} parent=1 // pred_check_branch
      %80 = sbr.rel (0) target = $region45
    $region44: #{embednet_forward.1} parent=1 // pred_region
      %81 = dma.done [#allocation9], 1024
    $region45: #{embednet_forward.1} parent=1 // pred_fallthru
      _
    %v83 = vld [vmem:[#allocation2] sm:$0xff]
    %v84 = vld [vmem:[#allocation2 + $0x8] sm:$0xff]
    %v85 = vpack.c.bf16 %v84, %v83
    %v86 = vld [vmem:[#allocation5] sm:$0xf]
    %v87 = vld [vmem:[#allocation5 + $0x4] sm:$0xf]
    %v88 = vld [vmem:[#allocation5 + $0x8] sm:$0xf]
    %v89 = vld [vmem:[#allocation5 + $0xc] sm:$0xf]
    %v90 = vld [vmem:[%s2] sm:$0x1]
    %v92 = vlaneseq
    %v93 = vshrl.u32 %v92, 7
    %v94 = vsub.s32 0, %v93
    %v95 = vrot.slane %v90, %v94
    %v101 = vunpack.c.l.b16 %v86
    %v102 = vunpack.c.l.b16 %v87
    %v103 = vunpack.c.l.b16 %v88
    %v104 = vunpack.c.l.b16 %v89
    %v105 = vpack.c.b16 %v102, %v101
    %v106 = vpack.c.b16 %v104, %v103
    %vm109 = vcmask 261120
    %v111 = vsel %vm109, %v85, 0
    %113 = vmatprep.subr.bf16.mxu0 0
    %114 = vmatpush1.bf16.msra.mxu0 %v105
    %115 = vmatprep.subr.bf16.mxu0 0
    %116 = vmatpush1.bf16.msra.mxu0 %v106
    %117 = vmatprep.subr.bf16.mxu0 0
    %118 = vmatpush1.bf16.msra.mxu0 0
    %119 = vmatprep.subr.bf16.mxu0 0
    %120 = vmatpush1.bf16.msra.mxu0 0
    %121 = vmatprep.subr.bf16.mxu0 0
    %122 = vmatpush1.bf16.msra.mxu0 0
    %123 = vmatprep.subr.bf16.mxu0 0
    %124 = vmatpush1.bf16.msra.mxu0 0
    %125 = vmatprep.subr.bf16.mxu0 0
    %126 = vmatpush1.bf16.msra.mxu0 0
    %127 = vmatprep.subr.bf16.mxu0 0
    %128 = vmatpush1.bf16.msra.mxu0 0
    %129 = vmatprep.subr.bf16.mxu0 0
    %130 = vmatpush1.bf16.msra.mxu0 0
    %131 = vmatprep.subr.bf16.mxu0 0
    %132 = vmatpush1.bf16.msra.mxu0 0
    %133 = vmatprep.subr.bf16.mxu0 0
    %134 = vmatpush1.bf16.msra.mxu0 0
    %135 = vmatprep.subr.bf16.mxu0 0
    %136 = vmatpush1.bf16.msra.mxu0 0
    %137 = vmatprep.subr.bf16.mxu0 0
    %138 = vmatpush1.bf16.msra.mxu0 0
    %139 = vmatprep.subr.bf16.mxu0 0
    %140 = vmatpush1.bf16.msra.mxu0 0
    %141 = vmatprep.subr.bf16.mxu0 0
    %142 = vmatpush1.bf16.msra.mxu0 0
    %143 = vmatprep.subr.bf16.mxu0 0
    %144 = vmatpush1.bf16.msra.mxu0 0
    %145 = vmatprep.mubr.bf16.mxu0 0
    %146 = vmatmul.mubr.bf16.gmra.mrb[0].mxu0 %v111
    %v147 = vpop.f32.mrb[0].mxu0
    %v148 = vadd.f32 %v95, %v147
    %v149 = vpop.f32.mrb[0].mxu0
    %v150 = vpop.f32.mrb[0].mxu0
    %v151 = vadd.f32 %v95, %v150
    %v152 = vpop.f32.mrb[0].mxu0
    %153 = vdwg.mxu0
    %vm154 = vcmp.gt.f32.partialorder %v148, 0.0
    %vm155 = vcmp.gt.f32.partialorder %v151, 0.0
    %v156 = vmul.f32 %v148, 0.01
    %v157 = vmul.f32 %v151, 0.01
    %v158 = vsel %vm154, %v148, %v156
    %v159 = vsel %vm155, %v151, %v157
    %v160 = vpack.c.bf16 %v159, %v158
    %v161 = vld [vmem:[#allocation7] sm:$0xf]
    %v162 = vld [vmem:[#allocation7 + $0x4] sm:$0xf]
    %v163 = vld [vmem:[#allocation7 + $0x8] sm:$0xf]
    %v164 = vld [vmem:[#allocation7 + $0xc] sm:$0xf]
    %v165 = vld [vmem:[#allocation7 + $0x10] sm:$0xf]
    %v166 = vld [vmem:[#allocation7 + $0x14] sm:$0xf]
    %v167 = vld [vmem:[#allocation7 + $0x18] sm:$0xf]
    %v168 = vld [vmem:[#allocation7 + $0x1c] sm:$0xf]
    %v169 = vld [vmem:[#allocation7 + $0x20] sm:$0xf]
    %v170 = vld [vmem:[#allocation7 + $0x24] sm:$0xf]
    %v171 = vld [vmem:[#allocation7 + $0x28] sm:$0xf]
    %v172 = vld [vmem:[#allocation7 + $0x2c] sm:$0xf]
    %v173 = vld [vmem:[#allocation7 + $0x30] sm:$0xf]
    %v174 = vld [vmem:[#allocation7 + $0x34] sm:$0xf]
    %v175 = vld [vmem:[#allocation7 + $0x38] sm:$0xf]
    %v176 = vld [vmem:[#allocation7 + $0x3c] sm:$0xf]
    %v177 = vld [vmem:[%s4] sm:$0x1]
    %v179 = vlaneseq
    %v180 = vshrl.u32 %v179, 7
    %v181 = vsub.s32 0, %v180
    %v182 = vrot.slane %v177, %v181
    %v200 = vunpack.c.l.b16 %v161
    %v201 = vunpack.c.l.b16 %v162
    %v202 = vunpack.c.l.b16 %v163
    %v203 = vunpack.c.l.b16 %v164
    %v204 = vunpack.c.l.b16 %v165
    %v205 = vunpack.c.l.b16 %v166
    %v206 = vunpack.c.l.b16 %v167
    %v207 = vunpack.c.l.b16 %v168
    %v208 = vunpack.c.l.b16 %v169
    %v209 = vunpack.c.l.b16 %v170
    %v210 = vunpack.c.l.b16 %v171
    %v211 = vunpack.c.l.b16 %v172
    %v212 = vunpack.c.l.b16 %v173
    %v213 = vunpack.c.l.b16 %v174
    %v214 = vunpack.c.l.b16 %v175
    %v215 = vunpack.c.l.b16 %v176
    %v216 = vpack.c.b16 %v201, %v200
    %v217 = vpack.c.b16 %v203, %v202
    %v218 = vpack.c.b16 %v205, %v204
    %v219 = vpack.c.b16 %v207, %v206
    %v220 = vpack.c.b16 %v209, %v208
    %v221 = vpack.c.b16 %v211, %v210
    %v222 = vpack.c.b16 %v213, %v212
    %v223 = vpack.c.b16 %v215, %v214
    %232 = vmatprep.subr.bf16.mxu0 0
    %233 = vmatpush1.bf16.msra.mxu0 %v216
    %234 = vmatprep.subr.bf16.mxu0 0
    %235 = vmatpush1.bf16.msra.mxu0 %v217
    %236 = vmatprep.subr.bf16.mxu0 0
    %237 = vmatpush1.bf16.msra.mxu0 %v218
    %238 = vmatprep.subr.bf16.mxu0 0
    %239 = vmatpush1.bf16.msra.mxu0 %v219
    %240 = vmatprep.subr.bf16.mxu0 0
    %241 = vmatpush1.bf16.msra.mxu0 %v220
    %242 = vmatprep.subr.bf16.mxu0 0
    %243 = vmatpush1.bf16.msra.mxu0 %v221
    %244 = vmatprep.subr.bf16.mxu0 0
    %245 = vmatpush1.bf16.msra.mxu0 %v222
    %246 = vmatprep.subr.bf16.mxu0 0
    %247 = vmatpush1.bf16.msra.mxu0 %v223
    %248 = vmatprep.subr.bf16.mxu0 0
    %249 = vmatpush1.bf16.msra.mxu0 0
    %250 = vmatprep.subr.bf16.mxu0 0
    %251 = vmatpush1.bf16.msra.mxu0 0
    %252 = vmatprep.subr.bf16.mxu0 0
    %253 = vmatpush1.bf16.msra.mxu0 0
    %254 = vmatprep.subr.bf16.mxu0 0
    %255 = vmatpush1.bf16.msra.mxu0 0
    %256 = vmatprep.subr.bf16.mxu0 0
    %257 = vmatpush1.bf16.msra.mxu0 0
    %258 = vmatprep.subr.bf16.mxu0 0
    %259 = vmatpush1.bf16.msra.mxu0 0
    %260 = vmatprep.subr.bf16.mxu0 0
    %261 = vmatpush1.bf16.msra.mxu0 0
    %262 = vmatprep.subr.bf16.mxu0 0
    %263 = vmatpush1.bf16.msra.mxu0 0
    %264 = vmatprep.mubr.bf16.mxu0 0
    %265 = vmatmul.mubr.bf16.gmra.mrb[0].mxu0 %v160
    %v266 = vpop.f32.mrb[0].mxu0
    %v267 = vadd.f32 %v182, %v266
    %v268 = vpop.f32.mrb[0].mxu0
    %v269 = vpop.f32.mrb[0].mxu0
    %v270 = vadd.f32 %v182, %v269
    %v271 = vpop.f32.mrb[0].mxu0
    %272 = vdwg.mxu0
    %vm273 = vcmp.gt.f32.partialorder %v267, 0.0
    %vm274 = vcmp.gt.f32.partialorder %v270, 0.0
    %v275 = vmul.f32 %v267, 0.01
    %v276 = vmul.f32 %v270, 0.01
    %v277 = vsel %vm273, %v267, %v275
    %v278 = vsel %vm274, %v270, %v276
    %v279 = vpack.c.bf16 %v278, %v277
    %v280 = vld [vmem:[#allocation8] sm:$0xf]
    %v281 = vld [vmem:[#allocation8 + $0x4] sm:$0xf]
    %v282 = vld [vmem:[#allocation8 + $0x8] sm:$0xf]
    %v283 = vld [vmem:[#allocation8 + $0xc] sm:$0xf]
    %v284 = vld [vmem:[#allocation8 + $0x10] sm:$0xf]
    %v285 = vld [vmem:[#allocation8 + $0x14] sm:$0xf]
    %v286 = vld [vmem:[#allocation8 + $0x18] sm:$0xf]
    %v287 = vld [vmem:[#allocation8 + $0x1c] sm:$0xf]
    %v288 = vld [vmem:[#allocation8 + $0x20] sm:$0xf]
    %v289 = vld [vmem:[#allocation8 + $0x24] sm:$0xf]
    %v290 = vld [vmem:[#allocation8 + $0x28] sm:$0xf]
    %v291 = vld [vmem:[#allocation8 + $0x2c] sm:$0xf]
    %v292 = vld [vmem:[#allocation8 + $0x30] sm:$0xf]
    %v293 = vld [vmem:[#allocation8 + $0x34] sm:$0xf]
    %v294 = vld [vmem:[#allocation8 + $0x38] sm:$0xf]
    %v295 = vld [vmem:[#allocation8 + $0x3c] sm:$0xf]
    %v296 = vld [vmem:[%s6] sm:$0x1]
    %v298 = vlaneseq
    %v299 = vshrl.u32 %v298, 7
    %v300 = vsub.s32 0, %v299
    %v301 = vrot.slane %v296, %v300
    %v319 = vunpack.c.l.b16 %v280
    %v320 = vunpack.c.l.b16 %v281
    %v321 = vunpack.c.l.b16 %v282
    %v322 = vunpack.c.l.b16 %v283
    %v323 = vunpack.c.l.b16 %v284
    %v324 = vunpack.c.l.b16 %v285
    %v325 = vunpack.c.l.b16 %v286
    %v326 = vunpack.c.l.b16 %v287
    %v327 = vunpack.c.l.b16 %v288
    %v328 = vunpack.c.l.b16 %v289
    %v329 = vunpack.c.l.b16 %v290
    %v330 = vunpack.c.l.b16 %v291
    %v331 = vunpack.c.l.b16 %v292
    %v332 = vunpack.c.l.b16 %v293
    %v333 = vunpack.c.l.b16 %v294
    %v334 = vunpack.c.l.b16 %v295
    %v335 = vpack.c.b16 %v320, %v319
    %v336 = vpack.c.b16 %v322, %v321
    %v337 = vpack.c.b16 %v324, %v323
    %v338 = vpack.c.b16 %v326, %v325
    %v339 = vpack.c.b16 %v328, %v327
    %v340 = vpack.c.b16 %v330, %v329
    %v341 = vpack.c.b16 %v332, %v331
    %v342 = vpack.c.b16 %v334, %v333
    %351 = vmatprep.subr.bf16.mxu0 0
    %352 = vmatpush1.bf16.msra.mxu0 %v335
    %353 = vmatprep.subr.bf16.mxu0 0
    %354 = vmatpush1.bf16.msra.mxu0 %v336
    %355 = vmatprep.subr.bf16.mxu0 0
    %356 = vmatpush1.bf16.msra.mxu0 %v337
    %357 = vmatprep.subr.bf16.mxu0 0
    %358 = vmatpush1.bf16.msra.mxu0 %v338
    %359 = vmatprep.subr.bf16.mxu0 0
    %360 = vmatpush1.bf16.msra.mxu0 %v339
    %361 = vmatprep.subr.bf16.mxu0 0
    %362 = vmatpush1.bf16.msra.mxu0 %v340
    %363 = vmatprep.subr.bf16.mxu0 0
    %364 = vmatpush1.bf16.msra.mxu0 %v341
    %365 = vmatprep.subr.bf16.mxu0 0
    %366 = vmatpush1.bf16.msra.mxu0 %v342
    %367 = vmatprep.subr.bf16.mxu0 0
    %368 = vmatpush1.bf16.msra.mxu0 0
    %369 = vmatprep.subr.bf16.mxu0 0
    %370 = vmatpush1.bf16.msra.mxu0 0
    %371 = vmatprep.subr.bf16.mxu0 0
    %372 = vmatpush1.bf16.msra.mxu0 0
    %373 = vmatprep.subr.bf16.mxu0 0
    %374 = vmatpush1.bf16.msra.mxu0 0
    %375 = vmatprep.subr.bf16.mxu0 0
    %376 = vmatpush1.bf16.msra.mxu0 0
    %377 = vmatprep.subr.bf16.mxu0 0
    %378 = vmatpush1.bf16.msra.mxu0 0
    %379 = vmatprep.subr.bf16.mxu0 0
    %380 = vmatpush1.bf16.msra.mxu0 0
    %381 = vmatprep.subr.bf16.mxu0 0
    %382 = vmatpush1.bf16.msra.mxu0 0
    %383 = vmatprep.mubr.bf16.mxu0 0
    %384 = vmatmul.mubr.bf16.gmra.mrb[0].mxu0 %v279
    %v385 = vpop.f32.mrb[0].mxu0
    %v386 = vadd.f32 %v301, %v385
    %v387 = vpop.f32.mrb[0].mxu0
    %v388 = vpop.f32.mrb[0].mxu0
    %v389 = vadd.f32 %v301, %v388
    %v390 = vpop.f32.mrb[0].mxu0
    %391 = vdwg.mxu0
    %vm392 = vcmp.gt.f32.partialorder %v386, 0.0
    %vm393 = vcmp.gt.f32.partialorder %v389, 0.0
    %v394 = vmul.f32 %v386, 0.01
    %v395 = vmul.f32 %v389, 0.01
    %v396 = vsel %vm392, %v386, %v394
    %v397 = vsel %vm393, %v389, %v395
    %398 = vst [vmem:[#allocation10] sm:$0xff] %v396
    %399 = vst [vmem:[#allocation10 + $0x8] sm:$0xff] %v397
    // Predicated region
    $region46: #{embednet_forward.1} parent=1 // pred_check
      _
    $region47: #{embednet_forward.1} parent=1 // pred_check_branch
      %401 = sbr.rel (0) target = $region49
    $region48: #{embednet_forward.1} parent=1 // pred_region
      %s403 = ssub.s32 256, 256
      %404 = vsyncadd [#allocation4], %s403
      %s405 = sshll.u32 [#allocation10], 4
      %s406 = int_to_ptr.vmem [resolvable:$true] %s405
      %411 = dma.vmem_to_hbm [thread:$0]  %s406, 256, %s7, [#allocation4], 128, 128, 8
    $region49: #{embednet_forward.1} parent=1 // pred_fallthru
      _
    // Predicated region
    $region50: #{embednet_forward.1} parent=1 // pred_check
      _
    $region51: #{embednet_forward.1} parent=1 // pred_check_branch
      %413 = sbr.rel (0) target = $region53
    $region52: #{embednet_forward.1} parent=1 // pred_region
      %414 = dma.done [#allocation4], 256
    $region53: #{embednet_forward.1} parent=1 // pred_fallthru
      _
    %415 = vsyncpa [#allocation3], 1
    %416 = vsyncpa [#allocation6], 1
    %417 = vsyncpa [#allocation9], 1
    %418 = vsyncpa [#allocation4], 1

</llo_original>
